<compile_context>
chip_gen: v5e
topology: v5e:2x2
jax: 0.10.0
libtpu: 0.0.40
codegen_flags: <defaults>
</compile_context>

<pallas_src>
import functools
import math

import jax
import jax.numpy as jnp
from jax.experimental import pallas as pl
from jax.experimental.pallas import tpu as pltpu


def _round_up(x: int, m: int) -> int:
    return ((x + m - 1) // m) * m


def _pos_encoding_kernel(x_ref, o_ref, *, seq_len: int):
    # x_ref / o_ref : (tm, D) tile of the flattened (B*S, D) token matrix.
    tm, d_model = x_ref.shape

    # Global row index of each sublane -> sequence position (row % S).
    row0 = pl.program_id(0) * tm
    local = jax.lax.broadcasted_iota(jnp.int32, (tm, 1), 0)
    pos = ((row0 + local) % seq_len).astype(jnp.float32)              # (tm, 1)

    # Per-lane frequency and sin/cos phase, built from a lane iota (once per tile).
    lane = jax.lax.broadcasted_iota(jnp.int32, (1, d_model), 1)       # (1, D)
    two_k = (lane - (lane % 2)).astype(jnp.float32)                   # 2*floor(d/2)
    inv_freq = jnp.exp(two_k * (-(math.log(10000.0) / d_model)))      # (1, D)
    phase = (lane % 2).astype(jnp.float32) * (math.pi / 2.0)          # 0 / pi/2

    # Single transcendental per element: sin(x + pi/2) == cos(x) on odd lanes.
    pe = jnp.sin(pos * inv_freq + phase)                              # (tm, D) f32

    if jnp.issubdtype(o_ref.dtype, jnp.floating) and jnp.dtype(o_ref.dtype).itemsize < 4:
        # bf16/fp16: cast pe once, add natively (v6e/v7x native bf16 VALU).
        o_ref[...] = x_ref[...] + pe.astype(o_ref.dtype)
    else:
        o_ref[...] = (x_ref[...].astype(jnp.float32) + pe).astype(o_ref.dtype)


def positional_encoding(x, *, target_block_bytes: int = 2 << 20):
    """x: (B, S, D) -> (B, S, D).  out = x + sinusoidal_pe[:S]  (eval-mode dropout)."""
    B, S, D = x.shape
    rows = B * S
    x2 = x.reshape(rows, D)
    itemsize = jnp.dtype(x.dtype).itemsize

    # Row tile targeting ~2 MiB blocks; 8-aligned, clamped to [256, 4096] rows.
    tm = target_block_bytes // max(D * itemsize, 1)
    tm = _round_up(min(max(tm, 256), 4096), 8)

    grid = pl.cdiv(rows, tm)
    # Prefer >= 2 (even) grid steps for the v7x 2-TC megacore split when there is
    # enough work; single-TC chips (v5e/v6e) are unaffected.
    if grid == 1 and rows >= 512:
        grid = 2
    elif grid > 1 and grid % 2 == 1:
        grid += 1
    tm = _round_up(pl.cdiv(rows, grid), 8)
    grid = pl.cdiv(rows, tm)          # ragged tail handled by Pallas block masking

    # Explicit VMEM budget: double-buffered input + output tiles + headroom.
    # Cap depends on the chip: v7x has 64 MiB physical VMEM per TC (stay <= 48 MiB),
    # v5e/v6e have 128 MiB (allow up to 96 MiB).
    try:
        phys_vmem = getattr(pltpu.get_tpu_info(), "vmem_capacity_bytes", 64 << 20)
    except Exception:  # conservative fallback
        phys_vmem = 64 << 20
    cap = (48 << 20) if phys_vmem <= (64 << 20) else (96 << 20)
    needed = 4 * tm * D * itemsize + (4 << 20)
    vmem_limit = int(min(max(needed, 8 << 20), cap))

    out = pl.pallas_call(
        functools.partial(_pos_encoding_kernel, seq_len=S),
        out_shape=jax.ShapeDtypeStruct((rows, D), x.dtype),
        grid_spec=pltpu.PrefetchScalarGridSpec(
            num_scalar_prefetch=0,
            grid=(grid,),
            in_specs=[pl.BlockSpec((tm, D), lambda i: (i, 0))],
            out_specs=pl.BlockSpec((tm, D), lambda i: (i, 0)),
        ),
        compiler_params=pltpu.CompilerParams(
            dimension_semantics=("parallel",),
            vmem_limit_bytes=vmem_limit,
        ),
    )(x2)

    return out.reshape(B, S, D)


def _reference(x):
    """Pure-JAX reference mirroring the PyTorch forward (eval mode, even D)."""
    B, S, D = x.shape
    pos = jnp.arange(S, dtype=jnp.float32)[:, None]
    div_term = jnp.exp(jnp.arange(0, D, 2, dtype=jnp.float32)
                       * -(math.log(10000.0) / D))
    pe = jnp.zeros((S, D), jnp.float32)
    pe = pe.at[:, 0::2].set(jnp.sin(pos * div_term))
    pe = pe.at[:, 1::2].set(jnp.cos(pos * div_term))
    return (x.astype(jnp.float32) + pe[None]).astype(x.dtype)


if __name__ == "__main__":
    key = jax.random.PRNGKey(0)
    k1, k2, k3 = jax.random.split(key, 3)

    # Case 1: batch=2, seq=8, d_model=128 (lane-dense, rows multiple of 8).
    B, S, D = 2, 8, 128
    x = jax.random.normal(k1, (B, S, D), dtype=jnp.float32)
    out = jax.block_until_ready(positional_encoding(x))
    ref = _reference(x)
    assert out.shape == (B, S, D)
    assert jnp.allclose(out, ref, atol=1e-4, rtol=1e-4), "mismatch vs reference (case 1)"

    # Case 2: rows = 21 (not a multiple of 8) -> exercises the ragged boundary block.
    B2, S2, D2 = 3, 7, 128
    x2 = jax.random.normal(k2, (B2, S2, D2), dtype=jnp.float32)
    out2 = jax.block_until_ready(positional_encoding(x2))
    ref2 = _reference(x2)
    assert out2.shape == (B2, S2, D2)
    assert jnp.allclose(out2, ref2, atol=1e-4, rtol=1e-4), "mismatch vs reference (case 2)"

    # Case 3: bf16 input -> native low-precision add path.
    x3 = jax.random.normal(k3, (2, 8, 128), dtype=jnp.bfloat16)
    out3 = jax.block_until_ready(positional_encoding(x3))
    ref3 = _reference(x3)
    assert out3.dtype == jnp.bfloat16
    assert jnp.allclose(out3.astype(jnp.float32), ref3.astype(jnp.float32),
                        atol=3e-2, rtol=3e-2), "mismatch vs reference (case 3)"

    print("KERNEL_OK")
</pallas_src>

<mosaic_0001>
module attributes {stable_mosaic.version = 11 : i64} {
  func.func @_pos_encoding_kernel(%arg0: i32, %arg1: memref<16x128xf32, #tpu.memory_space<vmem>>, %arg2: memref<16x128xf32, #tpu.memory_space<vmem>>) attributes {dimension_semantics = [#tpu.dimension_semantics<parallel>], iteration_bounds = array<i64: 1>, scalar_prefetch = 0 : i64, scratch_operands = 0 : i64, tpu.core_type = #tpu.core_type<tc>, window_params = [{transform_indices = @transform_0, window_bounds = array<i64: 16, 128>}, {transform_indices = @transform_1, window_bounds = array<i64: 16, 128>}]} {
    %c16_i32 = arith.constant 16 : i32
    %0 = arith.muli %arg0, %c16_i32 : i32
    %1 = tpu.iota {dimensions = array<i32: 0>} : vector<16x1xi32>
    %2 = vector.broadcast %0 : i32 to vector<16x1xi32>
    %3 = arith.addi %2, %1 : vector<16x1xi32>
    %c8_i32 = arith.constant 8 : i32
    %c0_i32 = arith.constant 0 : i32
    %4 = arith.cmpi eq, %c8_i32, %c0_i32 : i32
    %c1_i32 = arith.constant 1 : i32
    %5 = arith.select %4, %c1_i32, %c8_i32 : i32
    %6 = vector.broadcast %5 : i32 to vector<16x1xi32>
    %7 = arith.remsi %3, %6 : vector<16x1xi32>
    %c0_i32_0 = arith.constant 0 : i32
    %8 = vector.broadcast %c0_i32_0 : i32 to vector<16x1xi32>
    %9 = arith.cmpi ne, %7, %8 : vector<16x1xi32>
    %c0_i32_1 = arith.constant 0 : i32
    %10 = vector.broadcast %c0_i32_1 : i32 to vector<16x1xi32>
    %11 = arith.cmpi slt, %7, %10 : vector<16x1xi32>
    %c0_i32_2 = arith.constant 0 : i32
    %12 = arith.cmpi slt, %5, %c0_i32_2 : i32
    %13 = vector.broadcast %12 : i1 to vector<16x1xi1>
    %14 = vector.broadcast %13 : vector<16x1xi1> to vector<16x1xi1>
    %15 = arith.xori %11, %14 : vector<16x1xi1>
    %16 = arith.andi %15, %9 : vector<16x1xi1>
    %17 = vector.broadcast %5 : i32 to vector<16x1xi32>
    %18 = arith.addi %7, %17 : vector<16x1xi32>
    %19 = arith.select %16, %18, %7 : vector<16x1xi1>, vector<16x1xi32>
    %20 = arith.sitofp %19 : vector<16x1xi32> to vector<16x1xf32>
    %21 = tpu.iota {dimensions = array<i32: 1>} : vector<1x128xi32>
    %c2_i32 = arith.constant 2 : i32
    %c0_i32_3 = arith.constant 0 : i32
    %22 = arith.cmpi eq, %c2_i32, %c0_i32_3 : i32
    %c1_i32_4 = arith.constant 1 : i32
    %23 = arith.select %22, %c1_i32_4, %c2_i32 : i32
    %24 = vector.broadcast %23 : i32 to vector<1x128xi32>
    %25 = arith.remsi %21, %24 : vector<1x128xi32>
    %c0_i32_5 = arith.constant 0 : i32
    %26 = vector.broadcast %c0_i32_5 : i32 to vector<1x128xi32>
    %27 = arith.cmpi ne, %25, %26 : vector<1x128xi32>
    %c0_i32_6 = arith.constant 0 : i32
    %28 = vector.broadcast %c0_i32_6 : i32 to vector<1x128xi32>
    %29 = arith.cmpi slt, %25, %28 : vector<1x128xi32>
    %c0_i32_7 = arith.constant 0 : i32
    %30 = arith.cmpi slt, %23, %c0_i32_7 : i32
    %31 = vector.broadcast %30 : i1 to vector<1x128xi1>
    %32 = vector.broadcast %31 : vector<1x128xi1> to vector<1x128xi1>
    %33 = arith.xori %29, %32 : vector<1x128xi1>
    %34 = arith.andi %33, %27 : vector<1x128xi1>
    %35 = vector.broadcast %23 : i32 to vector<1x128xi32>
    %36 = arith.addi %25, %35 : vector<1x128xi32>
    %37 = arith.select %34, %36, %25 : vector<1x128xi1>, vector<1x128xi32>
    %38 = arith.subi %21, %37 : vector<1x128xi32>
    %39 = arith.sitofp %38 : vector<1x128xi32> to vector<1x128xf32>
    %cst = arith.constant -0.0719557852 : f32
    %40 = vector.broadcast %cst : f32 to vector<1x128xf32>
    %41 = arith.mulf %39, %40 : vector<1x128xf32>
    %42 = math.exp %41 : vector<1x128xf32>
    %c2_i32_8 = arith.constant 2 : i32
    %c0_i32_9 = arith.constant 0 : i32
    %43 = arith.cmpi eq, %c2_i32_8, %c0_i32_9 : i32
    %c1_i32_10 = arith.constant 1 : i32
    %44 = arith.select %43, %c1_i32_10, %c2_i32_8 : i32
    %45 = vector.broadcast %44 : i32 to vector<1x128xi32>
    %46 = arith.remsi %21, %45 : vector<1x128xi32>
    %c0_i32_11 = arith.constant 0 : i32
    %47 = vector.broadcast %c0_i32_11 : i32 to vector<1x128xi32>
    %48 = arith.cmpi ne, %46, %47 : vector<1x128xi32>
    %c0_i32_12 = arith.constant 0 : i32
    %49 = vector.broadcast %c0_i32_12 : i32 to vector<1x128xi32>
    %50 = arith.cmpi slt, %46, %49 : vector<1x128xi32>
    %c0_i32_13 = arith.constant 0 : i32
    %51 = arith.cmpi slt, %44, %c0_i32_13 : i32
    %52 = vector.broadcast %51 : i1 to vector<1x128xi1>
    %53 = vector.broadcast %52 : vector<1x128xi1> to vector<1x128xi1>
    %54 = arith.xori %50, %53 : vector<1x128xi1>
    %55 = arith.andi %54, %48 : vector<1x128xi1>
    %56 = vector.broadcast %44 : i32 to vector<1x128xi32>
    %57 = arith.addi %46, %56 : vector<1x128xi32>
    %58 = arith.select %55, %57, %46 : vector<1x128xi1>, vector<1x128xi32>
    %59 = arith.sitofp %58 : vector<1x128xi32> to vector<1x128xf32>
    %cst_14 = arith.constant 1.57079637 : f32
    %60 = vector.broadcast %cst_14 : f32 to vector<1x128xf32>
    %61 = arith.mulf %59, %60 : vector<1x128xf32>
    %62 = vector.broadcast %20 : vector<16x1xf32> to vector<16x128xf32>
    %63 = vector.broadcast %42 : vector<1x128xf32> to vector<16x128xf32>
    %64 = arith.mulf %62, %63 : vector<16x128xf32>
    %65 = vector.broadcast %61 : vector<1x128xf32> to vector<16x128xf32>
    %66 = arith.addf %64, %65 : vector<16x128xf32>
    %67 = math.sin %66 : vector<16x128xf32>
    %c0 = arith.constant 0 : index
    %c0_15 = arith.constant 0 : index
    %68 = vector.load %arg1[%c0, %c0_15] : memref<16x128xf32, #tpu.memory_space<vmem>>, vector<16x128xf32>
    %69 = arith.addf %68, %67 : vector<16x128xf32>
    %c0_16 = arith.constant 0 : index
    %c0_17 = arith.constant 0 : index
    %70 = vector.load %arg2[%c0_16, %c0_17] : memref<16x128xf32, #tpu.memory_space<vmem>>, vector<16x128xf32>
    tpu.vector_store %arg2[%c0_16, %c0_17], %69 {strides = array<i32>} : memref<16x128xf32, #tpu.memory_space<vmem>>, vector<16x128xf32>,
    return
  }
  func.func @transform_0(%arg0: i32) -> (i32, i32) {
    %c0_i32 = arith.constant 0 : i32
    %c0_i32_0 = arith.constant 0 : i32
    return %arg0, %c0_i32 : i32, i32
  }
  func.func @transform_1(%arg0: i32) -> (i32, i32) {
    %c0_i32 = arith.constant 0 : i32
    %c0_i32_0 = arith.constant 0 : i32
    return %arg0, %c0_i32 : i32, i32
  }
}

</mosaic_0001>

<llo_original>
// kernel: tpu_custom_call.1
$region0: #{tpu_custom_call.1}
  #allocation0 [shape = 'u32[]', space=smem, size = 0x4, offset = 0x4, fixed_abs, tag = 'smem constant byte address 0x4 - core index']
  #allocation1 [shape = 'u32[72,128]{1,0:T(1,128)}', space=vmem, size = 0x9000, scoped, tag = 'internal scratch']
  %s0 = inlined_call_operand.hbm [shape: f32[16,128], index: 0, kind: input, shape index: {}]
  %s1 = inlined_call_operand.hbm [shape: f32[16,128], index: 1, kind: output, shape index: {}]
  %s2 = sld [smem:[#allocation0]]
  $region18: #{tpu_custom_call.1} parent=0
    _
  %s4 = ssub.s32 1, %s2
  %s5 = scalar_select 0, %s4, %s2
  $region1: #{tpu_custom_call.1} parent=0
    #allocation2 [shape = 'u8[8192]{0}', space=vmem, size = 0x2000, scoped, tag = 'input window, operand 0, single buffered']
    #allocation3 [shape = 's32[1]{0}', space=sflag, size = 0x4, scoped, tag = 'scoped memory for tpu_custom_call.1']
    #allocation4 [shape = 's32[1]{0}', space=sflag, size = 0x4, scoped, tag = 'scoped memory for tpu_custom_call.1']
    #allocation5 [shape = 'u8[8192]{0}', space=vmem, size = 0x2000, scoped, tag = 'output window, operand 0, single buffered']
    %6 = vsyncpa [#allocation3], 0
    %7 = vsyncpa [#allocation4], 0
    // Predicated region
    $region2: #{tpu_custom_call.1} parent=1 // pred_check
      _
    $region3: #{tpu_custom_call.1} parent=1 // pred_check_branch
      %9 = sbr.rel (0) target = $region5
    $region4: #{tpu_custom_call.1} parent=1 // pred_region
      %11 = vsyncadd [#allocation3], 0
      %s12 = sshll.u32 %s0, 4
      %s13 = int_to_ptr.hbm [resolvable:$true] %s12
      %s14 = sshll.u32 [#allocation2], 4
      %s15 = int_to_ptr.vmem [resolvable:$true] %s14
      %20 = dma.hbm_to_vmem [thread:$0]  %s13, 256, %s15, [#allocation3], 128, 128, 8
    $region5: #{tpu_custom_call.1} parent=1 // pred_fallthru
      _
    // Predicated region
    $region6: #{tpu_custom_call.1} parent=1 // pred_check
      _
    $region7: #{tpu_custom_call.1} parent=1 // pred_check_branch
      %22 = sbr.rel (0) target = $region9
    $region8: #{tpu_custom_call.1} parent=1 // pred_region
      %24 = dma.done [#allocation3], 256
    $region9: #{tpu_custom_call.1} parent=1 // pred_fallthru
      _
    %s25 = smul.u32 0, 16
    %v26 = vlaneseq
    %v27 = vshrl.u32 %v26, 7
    %v28 = vadd.s32 %v27, 8
    %v29 = vstv %s25
    %v30 = vadd.s32 %v29, %v27
    %v31 = vadd.s32 %v29, %v28
    %vm32 = vcmp.lt.s32.totalorder %v30, 0
    %v33 = vsub.s32 0, %v30
    %v34 = vsel %vm32, %v33, %v30
    %v35 = vshrl.u32 %v34, 3
    %v36 = vand.u32 %v34, 7
    %v37 = vsub.s32 0, %v36
    %v38 = vsel %vm32, %v37, %v36
    %vm39 = vcmp.lt.s32.totalorder %v31, 0
    %v40 = vsub.s32 0, %v31
    %v41 = vsel %vm39, %v40, %v31
    %v42 = vshrl.u32 %v41, 3
    %v43 = vand.u32 %v41, 7
    %v44 = vsub.s32 0, %v43
    %v45 = vsel %vm39, %v44, %v43
    %vm46 = vcmp.ne.s32.totalorder %v38, 0
    %vm47 = vcmp.ne.s32.totalorder %v45, 0
    %vm48 = vcmp.lt.s32.totalorder %v38, 0
    %vm49 = vcmp.lt.s32.totalorder %v45, 0
    %vm50 = vmand %vm48, %vm46
    %vm51 = vmand %vm49, %vm47
    %v52 = vadd.s32 %v38, 8
    %v53 = vadd.s32 %v45, 8
    %v54 = vsel %vm50, %v52, %v38
    %v55 = vsel %vm51, %v53, %v45
    %v56 = vcvt.s32.f32 %v54
    %v57 = vcvt.s32.f32 %v55
    %v58 = vlaneseq
    %v59 = vand.u32 %v58, 127
    %vm60 = vcmp.lt.s32.totalorder %v59, 0
    %v61 = vsub.s32 0, %v59
    %v62 = vsel %vm60, %v61, %v59
    %v63 = vshrl.u32 %v62, 1
    %v64 = vand.u32 %v62, 1
    %v65 = vsub.s32 0, %v64
    %v66 = vsel %vm60, %v65, %v64
    %vm67 = vcmp.ne.s32.totalorder %v66, 0
    %vm68 = vcmp.lt.s32.totalorder %v66, 0
    %vm69 = vmand %vm68, %vm67
    %v70 = vadd.s32 %v66, 2
    %v71 = vsel %vm69, %v70, %v66
    %v72 = vsub.s32 %v59, %v71
    %v73 = vcvt.s32.f32 %v72
    %v74 = vmul.f32 %v73, -0.071955785
    %v75 = vmul.f32 %v74, 1.442695
    %v76 = vpow.pop %v75
    %v77 = vcvt.s32.f32 %v71
    %v78 = vmul.f32 %v77, 1.5707964
    %v79 = vmul.f32 %v56, %v76
    %v80 = vmul.f32 %v57, %v76
    %v81 = vadd.f32 %v79, %v78
    %v82 = vadd.f32 %v80, %v78
    %v83 = vand.u32 2147483647, %v81
    %vm84 = vcmp.le.f32.partialorder %v83, 0.7853982
    %vm85 = vcmp.lt.s32.totalorder %v81, 0
    %v86 = vand.u32 %v81, 2139095040
    %v87 = vshrl.u32 %v86, 23
    %v88 = vsub.s32 %v87, 127
    %v89 = vand.u32 2147483647, %v81
    %v90 = vand.u32 %v89, 8388607
    %v91 = vor.u32 %v90, 8388608
    %v92 = vsub.s32 0, %v91
    %v93 = vadd.s32 %v88, 1
    %vm94 = vcmp.gt.s32.totalorder %v93, 0
    %v95 = vsel %vm94, %v93, 0
    %v96 = vshrl.u32 %v95, 5
    %v97 = vand.u32 %v95, 31
    %v98 = vsub.s32 32, %v97
    %v99 = vshrl.u32 683565275, %v98
    %v100 = vshll.u32 683565275, %v97
    %v101 = vshrl.u32 2475754826, %v98
    %v102 = vor.u32 %v100, %v101
    %v103 = vshll.u32 2475754826, %v97
    %v104 = vshrl.u32 2131351028, %v98
    %v105 = vor.u32 %v103, %v104
    %v106 = vshll.u32 2131351028, %v97
    %v107 = vshrl.u32 2102212464, %v98
    %v108 = vor.u32 %v106, %v107
    %v109 = vshll.u32 2102212464, %v97
    %v110 = vshrl.u32 920167782, %v98
    %v111 = vor.u32 %v109, %v110
    %v112 = vshll.u32 920167782, %v97
    %v113 = vshrl.u32 1326507024, %v98
    %v114 = vor.u32 %v112, %v113
    %vm115 = vcmp.lt.s32.totalorder %v96, 1
    %vm116 = vcmp.lt.s32.totalorder %v96, 2
    %vm117 = vcmp.lt.s32.totalorder %v96, 3
    %vm118 = vcmp.lt.s32.totalorder %v96, 4
    %v119 = vsel %vm115, %v99, %v102
    %v120 = vsel %vm118, %v108, 2102212464
    %v121 = vsel %vm117, %v105, %v120
    %v122 = vsel %vm116, %v119, %v121
    %v123 = vsel %vm115, %v102, %v105
    %v124 = vsel %vm118, %v111, 920167782
    %v125 = vsel %vm117, %v108, %v124
    %v126 = vsel %vm116, %v123, %v125
    %v127 = vsel %vm115, %v105, %v108
    %v128 = vsel %vm118, %v114, 1326507024
    %v129 = vsel %vm117, %v111, %v128
    %v130 = vsel %vm116, %v127, %v129
    %v131 = vshll.u32 %v91, 8
    %v132 = vand.u32 %v131, 65535
    %v133 = vshrl.u32 %v131, 16
    %v134 = vand.u32 %v130, 65535
    %v135 = vshrl.u32 %v130, 16
    %v136 = vmul.u32 %v132, %v134
    %v137 = vmul.u32 %v132, %v135
    %v138 = vmul.u32 %v133, %v134
    %v139 = vmul.u32 %v133, %v135
    %v140 = vshll.u32 %v137, 16
    %v141 = vshrl.u32 %v137, 16
    %v142 = vshll.u32 %v138, 16
    %v143 = vshrl.u32 %v138, 16
    %vm144 = vc.u32 %v136, %v140
    %v145 = vsel %vm144, 1, 0
    %v146 = vadd.s32 %v136, %v140
    %v147 = vadd.s32 %v139, %v145
    %vm148 = vc.u32 %v146, %v142
    %v149 = vsel %vm148, 1, 0
    %v150 = vadd.s32 %v146, %v142
    %v151 = vadd.s32 %v147, %v149
    %v152 = vadd.s32 %v151, %v141
    %v153 = vadd.s32 %v152, %v143
    %v154 = vand.u32 %v131, 65535
    %v155 = vshrl.u32 %v131, 16
    %v156 = vand.u32 %v126, 65535
    %v157 = vshrl.u32 %v126, 16
    %v158 = vmul.u32 %v154, %v156
    %v159 = vmul.u32 %v154, %v157
    %v160 = vmul.u32 %v155, %v156
    %v161 = vmul.u32 %v155, %v157
    %v162 = vshll.u32 %v159, 16
    %v163 = vshrl.u32 %v159, 16
    %v164 = vshll.u32 %v160, 16
    %v165 = vshrl.u32 %v160, 16
    %vm166 = vc.u32 %v158, %v162
    %v167 = vsel %vm166, 1, 0
    %v168 = vadd.s32 %v158, %v162
    %v169 = vadd.s32 %v161, %v167
    %vm170 = vc.u32 %v168, %v164
    %v171 = vsel %vm170, 1, 0
    %v172 = vadd.s32 %v168, %v164
    %v173 = vadd.s32 %v169, %v171
    %v174 = vadd.s32 %v173, %v163
    %v175 = vadd.s32 %v174, %v165
    %v176 = vmul.u32 %v131, %v122
    %v177 = vadd.s32 %v153, %v172
    %vm178 = vc.u32 %v153, %v172
    %v179 = vadd.s32 %v175, 1
    %v180 = vsel %vm178, %v179, %v175
    %v181 = vadd.s32 %v176, %v180
    %v182 = vadd.s32 %v181, 536870912
    %v183 = vshrl.u32 %v182, 30
    %v184 = vshll.u32 %v183, 30
    %v185 = vsub.s32 %v181, %v184
    %vm186 = vcmp.lt.s32.totalorder %v185, 0
    %v187 = vsub.s32 0, %v185
    %v188 = vsel %vm186, %v187, %v185
    %v189 = vclz %v188
    %v190 = vsub.s32 %v189, 2
    %vm191 = vcmp.gt.s32.totalorder 0, %v190
    %v192 = vsel %vm191, 0, %v190
    %v193 = vsub.s32 32, %v192
    %v194 = vshll.u32 %v185, %v192
    %v195 = vshrl.u32 %v177, %v193
    %v196 = vor.u32 %v194, %v195
    %v197 = vsub.s32 4294967266, %v192
    %v198 = vadd.s32 %v197, 127
    %v199 = vshll.u32 %v198, 23
    %v200 = vor.u32 4788187, %v199
    %v201 = vand.u32 2147483647, %v200
    %v203 = vcvt.s32.f32 %v196
    %v204 = vmul.f32 %v203, %v201
    %v205 = vxor.u32 %v204, 2147483648
    %v206 = vsel %vm85, %v205, %v204
    %v207 = vsub.s32 4, %v183
    %v208 = vsel %vm85, %v207, %v183
    %v209 = vsel %vm84, %v81, %v206
    %v210 = vsel %vm84, 0, %v208
    %v211 = vmul.f32 %v209, %v209
    %v212 = vmul.f32 %v211, -0.001358992
    %v213 = vadd.f32 %v212, 0.041655596
    %v214 = vmul.f32 %v211, %v213
    %v215 = vadd.f32 %v214, -0.4999988
    %v216 = vmul.f32 %v211, %v215
    %v217 = vadd.f32 1.0, %v216
    %v218 = vmul.f32 %v209, %v209
    %v219 = vmul.f32 %v218, -0.00019511016
    %v220 = vadd.f32 %v219, 0.008332121
    %v221 = vmul.f32 %v218, %v220
    %v222 = vadd.f32 %v221, -0.16666654
    %v223 = vmul.f32 %v218, %v222
    %v224 = vadd.f32 %v223, 1.0
    %v225 = vmul.f32 %v224, %v209
    %vm226 = vweird.f32 %v81
    %v227 = vadd.s32 %v210, 3
    %v228 = vand.u32 %v227, 3
    %vm229 = vcmp.lt.s32.totalorder %v228, 2
    %vm230 = vcmp.eq.s32.totalorder %v228, 0
    %v231 = vxor.u32 %v225, 2147483648
    %v232 = vsel %vm230, %v217, %v231
    %vm233 = vcmp.eq.s32.totalorder %v228, 2
    %v234 = vxor.u32 %v217, 2147483648
    %v235 = vsel %vm233, %v234, %v225
    %v236 = vsel %vm229, %v232, %v235
    %v237 = vsel %vm226, nan, %v236
    %v238 = vand.u32 2147483647, %v82
    %vm239 = vcmp.le.f32.partialorder %v238, 0.7853982
    %vm240 = vcmp.lt.s32.totalorder %v82, 0
    %v241 = vand.u32 %v82, 2139095040
    %v242 = vshrl.u32 %v241, 23
    %v243 = vsub.s32 %v242, 127
    %v244 = vand.u32 2147483647, %v82
    %v245 = vand.u32 %v244, 8388607
    %v246 = vor.u32 %v245, 8388608
    %v247 = vsub.s32 0, %v246
    %v248 = vadd.s32 %v243, 1
    %vm249 = vcmp.gt.s32.totalorder %v248, 0
    %v250 = vsel %vm249, %v248, 0
    %v251 = vshrl.u32 %v250, 5
    %v252 = vand.u32 %v250, 31
    %v253 = vsub.s32 32, %v252
    %v254 = vshrl.u32 683565275, %v253
    %v255 = vshll.u32 683565275, %v252
    %v256 = vshrl.u32 2475754826, %v253
    %v257 = vor.u32 %v255, %v256
    %v258 = vshll.u32 2475754826, %v252
    %v259 = vshrl.u32 2131351028, %v253
    %v260 = vor.u32 %v258, %v259
    %v261 = vshll.u32 2131351028, %v252
    %v262 = vshrl.u32 2102212464, %v253
    %v263 = vor.u32 %v261, %v262
    %v264 = vshll.u32 2102212464, %v252
    %v265 = vshrl.u32 920167782, %v253
    %v266 = vor.u32 %v264, %v265
    %v267 = vshll.u32 920167782, %v252
    %v268 = vshrl.u32 1326507024, %v253
    %v269 = vor.u32 %v267, %v268
    %vm270 = vcmp.lt.s32.totalorder %v251, 1
    %vm271 = vcmp.lt.s32.totalorder %v251, 2
    %vm272 = vcmp.lt.s32.totalorder %v251, 3
    %vm273 = vcmp.lt.s32.totalorder %v251, 4
    %v274 = vsel %vm270, %v254, %v257
    %v275 = vsel %vm273, %v263, 2102212464
    %v276 = vsel %vm272, %v260, %v275
    %v277 = vsel %vm271, %v274, %v276
    %v278 = vsel %vm270, %v257, %v260
    %v279 = vsel %vm273, %v266, 920167782
    %v280 = vsel %vm272, %v263, %v279
    %v281 = vsel %vm271, %v278, %v280
    %v282 = vsel %vm270, %v260, %v263
    %v283 = vsel %vm273, %v269, 1326507024
    %v284 = vsel %vm272, %v266, %v283
    %v285 = vsel %vm271, %v282, %v284
    %v286 = vshll.u32 %v246, 8
    %v287 = vand.u32 %v286, 65535
    %v288 = vshrl.u32 %v286, 16
    %v289 = vand.u32 %v285, 65535
    %v290 = vshrl.u32 %v285, 16
    %v291 = vmul.u32 %v287, %v289
    %v292 = vmul.u32 %v287, %v290
    %v293 = vmul.u32 %v288, %v289
    %v294 = vmul.u32 %v288, %v290
    %v295 = vshll.u32 %v292, 16
    %v296 = vshrl.u32 %v292, 16
    %v297 = vshll.u32 %v293, 16
    %v298 = vshrl.u32 %v293, 16
    %vm299 = vc.u32 %v291, %v295
    %v300 = vsel %vm299, 1, 0
    %v301 = vadd.s32 %v291, %v295
    %v302 = vadd.s32 %v294, %v300
    %vm303 = vc.u32 %v301, %v297
    %v304 = vsel %vm303, 1, 0
    %v305 = vadd.s32 %v301, %v297
    %v306 = vadd.s32 %v302, %v304
    %v307 = vadd.s32 %v306, %v296
    %v308 = vadd.s32 %v307, %v298
    %v309 = vand.u32 %v286, 65535
    %v310 = vshrl.u32 %v286, 16
    %v311 = vand.u32 %v281, 65535
    %v312 = vshrl.u32 %v281, 16
    %v313 = vmul.u32 %v309, %v311
    %v314 = vmul.u32 %v309, %v312
    %v315 = vmul.u32 %v310, %v311
    %v316 = vmul.u32 %v310, %v312
    %v317 = vshll.u32 %v314, 16
    %v318 = vshrl.u32 %v314, 16
    %v319 = vshll.u32 %v315, 16
    %v320 = vshrl.u32 %v315, 16
    %vm321 = vc.u32 %v313, %v317
    %v322 = vsel %vm321, 1, 0
    %v323 = vadd.s32 %v313, %v317
    %v324 = vadd.s32 %v316, %v322
    %vm325 = vc.u32 %v323, %v319
    %v326 = vsel %vm325, 1, 0
    %v327 = vadd.s32 %v323, %v319
    %v328 = vadd.s32 %v324, %v326
    %v329 = vadd.s32 %v328, %v318
    %v330 = vadd.s32 %v329, %v320
    %v331 = vmul.u32 %v286, %v277
    %v332 = vadd.s32 %v308, %v327
    %vm333 = vc.u32 %v308, %v327
    %v334 = vadd.s32 %v330, 1
    %v335 = vsel %vm333, %v334, %v330
    %v336 = vadd.s32 %v331, %v335
    %v337 = vadd.s32 %v336, 536870912
    %v338 = vshrl.u32 %v337, 30
    %v339 = vshll.u32 %v338, 30
    %v340 = vsub.s32 %v336, %v339
    %vm341 = vcmp.lt.s32.totalorder %v340, 0
    %v342 = vsub.s32 0, %v340
    %v343 = vsel %vm341, %v342, %v340
    %v344 = vclz %v343
    %v345 = vsub.s32 %v344, 2
    %vm346 = vcmp.gt.s32.totalorder 0, %v345
    %v347 = vsel %vm346, 0, %v345
    %v348 = vsub.s32 32, %v347
    %v349 = vshll.u32 %v340, %v347
    %v350 = vshrl.u32 %v332, %v348
    %v351 = vor.u32 %v349, %v350
    %v352 = vsub.s32 4294967266, %v347
    %v353 = vadd.s32 %v352, 127
    %v354 = vshll.u32 %v353, 23
    %v355 = vor.u32 4788187, %v354
    %v356 = vand.u32 2147483647, %v355
    %v358 = vcvt.s32.f32 %v351
    %v359 = vmul.f32 %v358, %v356
    %v360 = vxor.u32 %v359, 2147483648
    %v361 = vsel %vm240, %v360, %v359
    %v362 = vsub.s32 4, %v338
    %v363 = vsel %vm240, %v362, %v338
    %v364 = vsel %vm239, %v82, %v361
    %v365 = vsel %vm239, 0, %v363
    %v366 = vmul.f32 %v364, %v364
    %v367 = vmul.f32 %v366, -0.001358992
    %v368 = vadd.f32 %v367, 0.041655596
    %v369 = vmul.f32 %v366, %v368
    %v370 = vadd.f32 %v369, -0.4999988
    %v371 = vmul.f32 %v366, %v370
    %v372 = vadd.f32 1.0, %v371
    %v373 = vmul.f32 %v364, %v364
    %v374 = vmul.f32 %v373, -0.00019511016
    %v375 = vadd.f32 %v374, 0.008332121
    %v376 = vmul.f32 %v373, %v375
    %v377 = vadd.f32 %v376, -0.16666654
    %v378 = vmul.f32 %v373, %v377
    %v379 = vadd.f32 %v378, 1.0
    %v380 = vmul.f32 %v379, %v364
    %vm381 = vweird.f32 %v82
    %v382 = vadd.s32 %v365, 3
    %v383 = vand.u32 %v382, 3
    %vm384 = vcmp.lt.s32.totalorder %v383, 2
    %vm385 = vcmp.eq.s32.totalorder %v383, 0
    %v386 = vxor.u32 %v380, 2147483648
    %v387 = vsel %vm385, %v372, %v386
    %vm388 = vcmp.eq.s32.totalorder %v383, 2
    %v389 = vxor.u32 %v372, 2147483648
    %v390 = vsel %vm388, %v389, %v380
    %v391 = vsel %vm384, %v387, %v390
    %v392 = vsel %vm381, nan, %v391
    %v393 = vld [vmem:[#allocation2] sm:$0xff]
    %v394 = vld [vmem:[#allocation2 + $0x8] sm:$0xff]
    %v395 = vadd.f32 %v393, %v237
    %v396 = vadd.f32 %v394, %v392
    %397 = vst [vmem:[#allocation5] sm:$0xff] %v395
    %398 = vst [vmem:[#allocation5 + $0x8] sm:$0xff] %v396
    // Predicated region
    $region10: #{tpu_custom_call.1} parent=1 // pred_check
      _
    $region11: #{tpu_custom_call.1} parent=1 // pred_check_branch
      %400 = sbr.rel (0) target = $region13
    $region12: #{tpu_custom_call.1} parent=1 // pred_region
      %402 = vsyncadd [#allocation4], 0
      %s403 = sshll.u32 [#allocation5], 4
      %s404 = int_to_ptr.vmem [resolvable:$true] %s403
      %s405 = sshll.u32 %s1, 4
      %s406 = int_to_ptr.hbm [resolvable:$true] %s405
      %411 = dma.vmem_to_hbm [thread:$0]  %s404, 256, %s406, [#allocation4], 128, 128, 8
    $region13: #{tpu_custom_call.1} parent=1 // pred_fallthru
      _
    // Predicated region
    $region14: #{tpu_custom_call.1} parent=1 // pred_check
      _
    $region15: #{tpu_custom_call.1} parent=1 // pred_check_branch
      %413 = sbr.rel (0) target = $region17
    $region16: #{tpu_custom_call.1} parent=1 // pred_region
      %415 = dma.done [#allocation4], 256
    $region17: #{tpu_custom_call.1} parent=1 // pred_fallthru
      _
    %416 = vsyncpa [#allocation3], 1
    %417 = vsyncpa [#allocation4], 1

</llo_original>
